<compile_context>
chip_gen: v7x
topology: tpu7x:2x2x1
jax: 0.10.0
libtpu: 0.0.40
codegen_flags: <defaults>
</compile_context>

<pallas_src>
import jax
import jax.numpy as jnp
from jax.experimental import pallas as pl
from jax.experimental.pallas import tpu as pltpu

_LANE = 128            # vreg lane width
_BF16_SUBLANE = 16     # bf16 sublane packing (rows of a bf16 block)
_MIN_ROWS_PER_CORE = 128   # split into >=2 tiles (v7x megacore) above 2x this


def _round_up(x, m):
    return (x + m - 1) // m * m


# ----------------------------------------------------------------------------
# Fused kernel: all dense+activation layers in a single pallas_call body.
# refs = (x_ref, w0_ref, b0_ref, w1_ref, b1_ref, ..., o_ref)
# ----------------------------------------------------------------------------
def _make_fused_net_kernel(n_layers):
    def kernel(*refs):
        x_ref = refs[0]
        o_ref = refs[-1]
        p_refs = refs[1:-1]

        h = x_ref[...]                                     # bf16 (bt, d)
        for li in range(n_layers):
            w_ref = p_refs[2 * li]                         # bf16 (in, out_p)
            b_ref = p_refs[2 * li + 1]                     # f32  (1,  out_p)
            # MXU matmul with bf16 operands, f32 accumulation.
            z = jnp.dot(h, w_ref[...], preferred_element_type=jnp.float32)
            z = z + b_ref[...]                             # (1, out_p) broadcast, f32
            if li < n_layers - 1:
                # sigmoid = 1 / (1 + exp(-z)); exp + approx reciprocal -> EUP.
                s = pl.reciprocal(1.0 + jnp.exp(-z), approx=True)   # f32
                h = s.astype(jnp.bfloat16)                 # bf16 operand for next MXU op
            else:
                # numerically-stable softmax in f32; pad lanes carry bias -1e30
                # so exp underflows to 0 and they do not perturb the row sum.
                m = jnp.max(z, axis=-1, keepdims=True)
                e = jnp.exp(z - m)
                denom = jnp.sum(e, axis=-1, keepdims=True)
                # exact reciprocal -> rows strictly normalized.
                o_ref[...] = (e * pl.reciprocal(denom, approx=False)).astype(o_ref.dtype)
    return kernel


# ----------------------------------------------------------------------------
# Parameter construction (done once, outside the kernel)
# ----------------------------------------------------------------------------
def init_params(key, layer_sizes):
    """Unpadded FC params: sigmoid hidden layers, softmax final layer."""
    params = []
    n_layers = len(layer_sizes) - 1
    keys = jax.random.split(key, 2 * n_layers)
    for i in range(n_layers):
        in_d, out_d = layer_sizes[i], layer_sizes[i + 1]
        kw, kb = keys[2 * i], keys[2 * i + 1]
        w = jax.random.normal(kw, (in_d, out_d), dtype=jnp.float32) / jnp.sqrt(in_d)
        bias = jax.random.normal(kb, (out_d,), dtype=jnp.float32) * 0.1
        kind = "softmax" if i == n_layers - 1 else "sigmoid"
        params.append((w, bias, kind))
    return params


def pad_params(params):
    """Pad layers to lane-dense (multiple-of-128) OUTPUT dims.

    * The first layer's K (input-feature) dim is NOT padded -- the kernel
      reads x at its true width (64 toy / 784 MNIST, both sublane-aligned).
    * Hidden (sigmoid) layers: zero-pad the bias.  Pad lanes then produce
      sigmoid(0)=0.5, but the NEXT layer's zero-padded weight rows annihilate
      their contribution, so the math is exact.
    * Final (softmax) layer: pad the bias with -1e30 (f32) so pad logits
      vanish in max/exp/sum and rows still sum to 1 over the real classes.
    * Weights are stored bf16 (MXU operands); biases stay f32 as (1, out_p).
    """
    padded = []
    prev_out_p = None
    for idx, (w, b, kind) in enumerate(params):
        in_d, out_d = w.shape
        in_p = in_d if idx == 0 else prev_out_p      # K matches previous padded out
        out_p = _round_up(out_d, _LANE)
        w_p = (jnp.zeros((in_p, out_p), jnp.float32)
               .at[:in_d, :out_d].set(w)
               .astype(jnp.bfloat16))
        pad_bias = 0.0 if kind == "sigmoid" else -1e30
        b_p = jnp.full((1, out_p), pad_bias, jnp.float32).at[0, :out_d].set(b)
        padded.append((w_p, b_p))
        prev_out_p = out_p
    return padded


# ----------------------------------------------------------------------------
# Network forward (mirrors the PyTorch Network.forward chaining)
# ----------------------------------------------------------------------------
def network_forward(image_nchw, padded_params, out_dim, *, batch_tile=1024):
    """image_nchw: (B, C, H, W).  padded_params: list of (W_p bf16, b_p f32)."""
    batch = image_nchw.shape[0]
    # Flatten + cast to bf16 only -- no padded f32 HBM materialization.
    x = image_nchw.reshape(batch, -1).astype(jnp.bfloat16)
    d = x.shape[1]   # true feature width (64 toy / 784 MNIST); not lane-padded

    # Balanced batch tiling: grid first, then even-sized tiles (x16 rows for
    # bf16 blocks), padding the batch only to grid*bt.
    grid_n = max(1, pl.cdiv(batch, batch_tile))
    if grid_n == 1 and batch >= 2 * _MIN_ROWS_PER_CORE:
        grid_n = 2           # give v7x's second TensorCore work; cheap elsewhere
    bt = _round_up(pl.cdiv(batch, grid_n), _BF16_SUBLANE)
    b_p = grid_n * bt
    if b_p != batch:
        x = jnp.pad(x, ((0, b_p - batch), (0, 0)))   # small bf16 pad, only if needed

    n_layers = len(padded_params)
    out_p = padded_params[-1][0].shape[1]

    in_specs = [pl.BlockSpec((bt, d), lambda i: (i, 0))]
    flat_args = [x]
    for (w_p, b_pd) in padded_params:
        # Whole (small) parameter tensors resident in VMEM, same block every
        # grid step (grid-invariant index_map), so they are fetched once.
        in_specs.append(pl.BlockSpec(w_p.shape, lambda i: (0, 0)))
        in_specs.append(pl.BlockSpec(b_pd.shape, lambda i: (0, 0)))
        flat_args += [w_p, b_pd]

    out_padded = pl.pallas_call(
        _make_fused_net_kernel(n_layers),
        out_shape=jax.ShapeDtypeStruct((b_p, out_p), jnp.float32),
        grid=(grid_n,),
        in_specs=in_specs,
        out_specs=pl.BlockSpec((bt, out_p), lambda i: (i, 0)),
        compiler_params=pltpu.CompilerParams(
            dimension_semantics=("parallel",),          # shard batch over TCs
            vmem_limit_bytes=32 * 1024 * 1024,          # safe on v5e/v6e/v7x
        ),
    )(*flat_args)

    # Strip batch/class padding in the wrapper.
    return out_padded[:batch, :out_dim]


# ----------------------------------------------------------------------------
# Pure-JAX reference (unpadded, f32) for a correctness sanity check
# ----------------------------------------------------------------------------
def reference_forward(image_nchw, params):
    b = image_nchw.shape[0]
    h = image_nchw.reshape(b, -1).astype(jnp.float32)
    for (w, bias, kind) in params:
        z = h @ w + bias
        h = jax.nn.sigmoid(z) if kind == "sigmoid" else jax.nn.softmax(z, axis=-1)
    return h


if __name__ == "__main__":
    key = jax.random.PRNGKey(0)
    k_img, k_par = jax.random.split(key)

    # small synthetic "digit" images: batch=2, 1 channel, 8x8 spatial -> D=64
    batch, c, h, w = 2, 1, 8, 8
    image = jax.random.normal(k_img, (batch, c, h, w), dtype=jnp.float32)

    # layer sizes: 64 (flattened image) -> 32 hidden (sigmoid) -> 10 (softmax)
    layer_sizes = [c * h * w, 32, 10]
    params = init_params(k_par, layer_sizes)
    padded_params = pad_params(params)

    out = network_forward(image, padded_params, layer_sizes[-1])
    out = jax.block_until_ready(out)

    assert out.shape == (batch, layer_sizes[-1])
    # softmax rows sum to ~1 (pad classes masked out, exact denominator)
    assert bool(jnp.allclose(jnp.sum(out, axis=-1), 1.0, atol=1e-2))
    # matches f32 reference within bf16-operand / approx-sigmoid tolerance
    ref = reference_forward(image, params)
    assert bool(jnp.allclose(out, ref, atol=3e-2))
    print("KERNEL_OK")
</pallas_src>

<mosaic_0001>
module attributes {stable_mosaic.version = 11 : i64} {
  func.func @kernel(%arg0: i32, %arg1: memref<16x64xbf16, #tpu.memory_space<vmem>>, %arg2: memref<64x128xbf16, #tpu.memory_space<vmem>>, %arg3: memref<1x128xf32, #tpu.memory_space<vmem>>, %arg4: memref<128x128xbf16, #tpu.memory_space<vmem>>, %arg5: memref<1x128xf32, #tpu.memory_space<vmem>>, %arg6: memref<16x128xf32, #tpu.memory_space<vmem>>) attributes {dimension_semantics = [#tpu.dimension_semantics<parallel>], iteration_bounds = array<i64: 1>, scalar_prefetch = 0 : i64, scratch_operands = 0 : i64, tpu.core_type = #tpu.core_type<tc>, window_params = [{transform_indices = @transform_0, window_bounds = array<i64: 16, 64>}, {pipeline_mode = #tpu.pipeline_mode<synchronous>, transform_indices = @transform_1, window_bounds = array<i64: 64, 128>}, {pipeline_mode = #tpu.pipeline_mode<synchronous>, transform_indices = @transform_2, window_bounds = array<i64: 1, 128>}, {pipeline_mode = #tpu.pipeline_mode<synchronous>, transform_indices = @transform_3, window_bounds = array<i64: 128, 128>}, {pipeline_mode = #tpu.pipeline_mode<synchronous>, transform_indices = @transform_4, window_bounds = array<i64: 1, 128>}, {transform_indices = @transform_5, window_bounds = array<i64: 16, 128>}]} {
    %c0 = arith.constant 0 : index
    %c0_0 = arith.constant 0 : index
    %0 = vector.load %arg1[%c0, %c0_0] : memref<16x64xbf16, #tpu.memory_space<vmem>>, vector<16x64xbf16>
    %c0_1 = arith.constant 0 : index
    %c0_2 = arith.constant 0 : index
    %1 = vector.load %arg2[%c0_1, %c0_2] : memref<64x128xbf16, #tpu.memory_space<vmem>>, vector<64x128xbf16>
    %cst = arith.constant dense<0.000000e+00> : vector<16x128xf32>
    %2 = tpu.matmul %0, %1, %cst {dimension_numbers = #tpu.dot_dimension_numbers<[1], [0], [0], [1], [0, 0, 1, 1], [], []>} : vector<16x64xbf16>, vector<64x128xbf16>, vector<16x128xf32> -> vector<16x128xf32>
    %c0_3 = arith.constant 0 : index
    %c0_4 = arith.constant 0 : index
    %3 = vector.load %arg3[%c0_3, %c0_4] : memref<1x128xf32, #tpu.memory_space<vmem>>, vector<1x128xf32>
    %4 = vector.broadcast %3 : vector<1x128xf32> to vector<16x128xf32>
    %5 = arith.addf %2, %4 : vector<16x128xf32>
    %cst_5 = arith.constant 0.000000e+00 : f32
    %6 = vector.broadcast %cst_5 : f32 to vector<16x128xf32>
    %7 = arith.subf %6, %5 : vector<16x128xf32>
    %8 = math.exp %7 : vector<16x128xf32>
    %cst_6 = arith.constant 1.000000e+00 : f32
    %9 = vector.broadcast %cst_6 : f32 to vector<16x128xf32>
    %10 = arith.addf %9, %8 : vector<16x128xf32>
    %11 = tpu.reciprocal %10 {approx = true} : vector<16x128xf32> -> vector<16x128xf32>
    %12 = arith.truncf %11 : vector<16x128xf32> to vector<16x128xbf16>
    %c0_7 = arith.constant 0 : index
    %c0_8 = arith.constant 0 : index
    %13 = vector.load %arg4[%c0_7, %c0_8] : memref<128x128xbf16, #tpu.memory_space<vmem>>, vector<128x128xbf16>
    %cst_9 = arith.constant dense<0.000000e+00> : vector<16x128xf32>
    %14 = tpu.matmul %12, %13, %cst_9 {dimension_numbers = #tpu.dot_dimension_numbers<[1], [0], [0], [1], [0, 0, 1, 1], [], []>} : vector<16x128xbf16>, vector<128x128xbf16>, vector<16x128xf32> -> vector<16x128xf32>
    %c0_10 = arith.constant 0 : index
    %c0_11 = arith.constant 0 : index
    %15 = vector.load %arg5[%c0_10, %c0_11] : memref<1x128xf32, #tpu.memory_space<vmem>>, vector<1x128xf32>
    %16 = vector.broadcast %15 : vector<1x128xf32> to vector<16x128xf32>
    %17 = arith.addf %14, %16 : vector<16x128xf32>
    %cst_12 = arith.constant dense<0xFF800000> : vector<16xf32>
    %18 = vector.multi_reduction <maximumf>, %17, %cst_12 [1] : vector<16x128xf32> to vector<16xf32>
    %19 = vector.shape_cast %18 : vector<16xf32> to vector<16x1xf32>
    %20 = vector.broadcast %19 : vector<16x1xf32> to vector<16x128xf32>
    %21 = arith.subf %17, %20 : vector<16x128xf32>
    %22 = math.exp %21 : vector<16x128xf32>
    %cst_13 = arith.constant dense<0.000000e+00> : vector<16xf32>
    %23 = vector.multi_reduction <add>, %22, %cst_13 [1] : vector<16x128xf32> to vector<16xf32>
    %24 = vector.shape_cast %23 : vector<16xf32> to vector<16x1xf32>
    %25 = tpu.reciprocal %24 : vector<16x1xf32> -> vector<16x1xf32>
    %26 = vector.broadcast %25 : vector<16x1xf32> to vector<16x128xf32>
    %27 = arith.mulf %22, %26 : vector<16x128xf32>
    %c0_14 = arith.constant 0 : index
    %c0_15 = arith.constant 0 : index
    %28 = vector.load %arg6[%c0_14, %c0_15] : memref<16x128xf32, #tpu.memory_space<vmem>>, vector<16x128xf32>
    tpu.vector_store %arg6[%c0_14, %c0_15], %27 {strides = array<i32>} : memref<16x128xf32, #tpu.memory_space<vmem>>, vector<16x128xf32>,
    return
  }
  func.func @transform_0(%arg0: i32) -> (i32, i32) {
    %c0_i32 = arith.constant 0 : i32
    %c0_i32_0 = arith.constant 0 : i32
    return %arg0, %c0_i32 : i32, i32
  }
  func.func @transform_1(%arg0: i32) -> (i32, i32) {
    %c0_i32 = arith.constant 0 : i32
    %c0_i32_0 = arith.constant 0 : i32
    %c0_i32_1 = arith.constant 0 : i32
    return %c0_i32, %c0_i32_0 : i32, i32
  }
  func.func @transform_2(%arg0: i32) -> (i32, i32) {
    %c0_i32 = arith.constant 0 : i32
    %c0_i32_0 = arith.constant 0 : i32
    %c0_i32_1 = arith.constant 0 : i32
    return %c0_i32, %c0_i32_0 : i32, i32
  }
  func.func @transform_3(%arg0: i32) -> (i32, i32) {
    %c0_i32 = arith.constant 0 : i32
    %c0_i32_0 = arith.constant 0 : i32
    %c0_i32_1 = arith.constant 0 : i32
    return %c0_i32, %c0_i32_0 : i32, i32
  }
  func.func @transform_4(%arg0: i32) -> (i32, i32) {
    %c0_i32 = arith.constant 0 : i32
    %c0_i32_0 = arith.constant 0 : i32
    %c0_i32_1 = arith.constant 0 : i32
    return %c0_i32, %c0_i32_0 : i32, i32
  }
  func.func @transform_5(%arg0: i32) -> (i32, i32) {
    %c0_i32 = arith.constant 0 : i32
    %c0_i32_0 = arith.constant 0 : i32
    return %arg0, %c0_i32 : i32, i32
  }
}

</mosaic_0001>

<llo_original>
// kernel: tpu_custom_call.1
$region0: #{tpu_custom_call.1}
  #allocation0 [shape = 'u32[]', space=smem, size = 0x4, offset = 0x4, fixed_abs, tag = 'smem constant byte address 0x4 - core index']
  #allocation1 [shape = 'u32[144,128]{1,0:T(1,128)}', space=vmem, size = 0x12000, scoped, tag = 'internal scratch']
  %s0 = inlined_call_operand.hbm [shape: bf16[16,64], index: 0, kind: input, shape index: {}]
  %s1 = inlined_call_operand.hbm [shape: bf16[64,128], index: 1, kind: input, shape index: {}]
  %s2 = inlined_call_operand.vmem [shape: f32[1,128], index: 2, kind: input, shape index: {}]
  %s3 = inlined_call_operand.hbm [shape: bf16[128,128], index: 3, kind: input, shape index: {}]
  %s4 = inlined_call_operand.vmem [shape: f32[1,128], index: 4, kind: input, shape index: {}]
  %s5 = inlined_call_operand.hbm [shape: f32[16,128], index: 5, kind: output, shape index: {}]
  %s6 = sld [smem:[#allocation0]]
  $region42: #{tpu_custom_call.1} parent=0
    _
  %s8 = ssub.s32 1, %s6
  %s9 = scalar_select 0, %s8, %s6
  $region1: #{tpu_custom_call.1} parent=0
    #allocation2 [shape = 'u8[4096]{0}', space=vmem, size = 0x1000, scoped, tag = 'input window, operand 0, single buffered']
    #allocation3 [shape = 's32[1]{0}', space=sflag, size = 0x4, scoped, tag = 'scoped memory for tpu_custom_call.1']
    #allocation4 [shape = 's32[1]{0}', space=sflag, size = 0x4, scoped, tag = 'scoped memory for tpu_custom_call.1']
    #allocation5 [shape = 'u8[16384]{0}', space=vmem, size = 0x4000, scoped, tag = 'input window, operand 1, single buffered']
    #allocation6 [shape = 's32[1]{0}', space=sflag, size = 0x4, scoped, tag = 'scoped memory for tpu_custom_call.1']
    #allocation7 [shape = 'u8[32768]{0}', space=vmem, size = 0x8000, scoped, tag = 'input window, operand 3, single buffered']
    #allocation8 [shape = 'u8[8192]{0}', space=vmem, size = 0x2000, scoped, tag = 'output window, operand 0, single buffered']
    %10 = vsyncpa [#allocation3], 0
    %11 = vsyncpa [#allocation6], 0
    %12 = vsyncpa [#allocation4], 0
    // Predicated region
    $region2: #{tpu_custom_call.1} parent=1 // pred_check
      _
    $region3: #{tpu_custom_call.1} parent=1 // pred_check_branch
      %14 = sbr.rel (0) target = $region5
    $region4: #{tpu_custom_call.1} parent=1 // pred_region
      %s16 = ssub.s32 128, 128
      %17 = vsyncadd [#allocation3], %s16
      %s18 = sshll.u32 [#allocation2], 4
      %s19 = int_to_ptr.vmem [resolvable:$true] %s18
      %24 = dma.hbm_to_vmem [thread:$0]  %s0, 128, %s19, [#allocation3], 64, 64, 4
    $region5: #{tpu_custom_call.1} parent=1 // pred_fallthru
      _
    // Predicated region
    $region6: #{tpu_custom_call.1} parent=1 // pred_check
      _
    $region7: #{tpu_custom_call.1} parent=1 // pred_check_branch
      %26 = sbr.rel (0) target = $region9
    $region8: #{tpu_custom_call.1} parent=1 // pred_region
      %s28 = ssub.s32 512, 512
      %29 = vsyncadd [#allocation6], %s28
      %s30 = sshll.u32 [#allocation5], 4
      %s31 = int_to_ptr.vmem [resolvable:$true] %s30
      %36 = dma.hbm_to_vmem [thread:$0]  %s1, 512, %s31, [#allocation6], 64, 64, 4
    $region9: #{tpu_custom_call.1} parent=1 // pred_fallthru
      _
    // Predicated region
    $region10: #{tpu_custom_call.1} parent=1 // pred_check
      _
    $region11: #{tpu_custom_call.1} parent=1 // pred_check_branch
      %38 = sbr.rel (0) target = $region13
    $region12: #{tpu_custom_call.1} parent=1 // pred_region
      _
    $region13: #{tpu_custom_call.1} parent=1 // pred_fallthru
      _
    // Predicated region
    $region14: #{tpu_custom_call.1} parent=1 // pred_check
      _
    $region15: #{tpu_custom_call.1} parent=1 // pred_check_branch
      %40 = sbr.rel (0) target = $region17
    $region16: #{tpu_custom_call.1} parent=1 // pred_region
      %s42 = ssub.s32 1024, 1024
      %43 = vsyncadd [#allocation6], %s42
      %s44 = sshll.u32 [#allocation7], 4
      %s45 = int_to_ptr.vmem [resolvable:$true] %s44
      %50 = dma.hbm_to_vmem [thread:$0]  %s3, 1024, %s45, [#allocation6], 64, 64, 4
    $region17: #{tpu_custom_call.1} parent=1 // pred_fallthru
      _
    // Predicated region
    $region18: #{tpu_custom_call.1} parent=1 // pred_check
      _
    $region19: #{tpu_custom_call.1} parent=1 // pred_check_branch
      %52 = sbr.rel (0) target = $region21
    $region20: #{tpu_custom_call.1} parent=1 // pred_region
      _
    $region21: #{tpu_custom_call.1} parent=1 // pred_fallthru
      _
    // Predicated region
    $region22: #{tpu_custom_call.1} parent=1 // pred_check
      _
    $region23: #{tpu_custom_call.1} parent=1 // pred_check_branch
      %54 = sbr.rel (0) target = $region25
    $region24: #{tpu_custom_call.1} parent=1 // pred_region
      %55 = dma.done [#allocation3], 128
    $region25: #{tpu_custom_call.1} parent=1 // pred_fallthru
      _
    // Predicated region
    $region26: #{tpu_custom_call.1} parent=1 // pred_check
      _
    $region27: #{tpu_custom_call.1} parent=1 // pred_check_branch
      %57 = sbr.rel (0) target = $region29
    $region28: #{tpu_custom_call.1} parent=1 // pred_region
      %58 = dma.done [#allocation6], 512
    $region29: #{tpu_custom_call.1} parent=1 // pred_fallthru
      _
    // Predicated region
    $region30: #{tpu_custom_call.1} parent=1 // pred_check
      _
    $region31: #{tpu_custom_call.1} parent=1 // pred_check_branch
      %60 = sbr.rel (0) target = $region33
    $region32: #{tpu_custom_call.1} parent=1 // pred_region
      %61 = dma.done [#allocation6], 1024
    $region33: #{tpu_custom_call.1} parent=1 // pred_fallthru
      _
    %v63 = vld [vmem:[#allocation2] sm:$0xf]
    %v64 = vld [vmem:[#allocation2 + $0x4] sm:$0xf]
    %v65 = vld [vmem:[#allocation5] sm:$0xf]
    %v66 = vld [vmem:[#allocation5 + $0x4] sm:$0xf]
    %v67 = vld [vmem:[#allocation5 + $0x8] sm:$0xf]
    %v68 = vld [vmem:[#allocation5 + $0xc] sm:$0xf]
    %v69 = vld [vmem:[#allocation5 + $0x10] sm:$0xf]
    %v70 = vld [vmem:[#allocation5 + $0x14] sm:$0xf]
    %v71 = vld [vmem:[#allocation5 + $0x18] sm:$0xf]
    %v72 = vld [vmem:[#allocation5 + $0x1c] sm:$0xf]
    %v73 = vld [vmem:[%s2] sm:$0x1]
    %v75 = vlaneseq
    %v76 = vshrl.u32 %v75, 7
    %v77 = vsub.s32 0, %v76
    %v78 = vrot.slane %v73, %v77
    %v82 = vunpack.c.l.b16 %v63
    %v83 = vunpack.c.l.b16 %v64
    %v84 = vpack.c.b16 %v83, %v82
    %v93 = vunpack.c.l.b16 %v65
    %v94 = vunpack.c.l.b16 %v66
    %v95 = vunpack.c.l.b16 %v67
    %v96 = vunpack.c.l.b16 %v68
    %v97 = vunpack.c.l.b16 %v69
    %v98 = vunpack.c.l.b16 %v70
    %v99 = vunpack.c.l.b16 %v71
    %v100 = vunpack.c.l.b16 %v72
    %v101 = vpack.c.b16 %v94, %v93
    %v102 = vpack.c.b16 %v96, %v95
    %v103 = vpack.c.b16 %v98, %v97
    %v104 = vpack.c.b16 %v100, %v99
    %vm109 = vcmask 523264
    %v111 = vsel %vm109, %v84, 0
    %113 = vmatprep.subr.bf16.mxu0 0
    %114 = vmatpush1.bf16.msra.mxu0 %v101
    %115 = vmatprep.subr.bf16.mxu0 0
    %116 = vmatpush1.bf16.msra.mxu0 %v102
    %117 = vmatprep.subr.bf16.mxu0 0
    %118 = vmatpush1.bf16.msra.mxu0 %v103
    %119 = vmatprep.subr.bf16.mxu0 0
    %120 = vmatpush1.bf16.msra.mxu0 %v104
    %121 = vmatprep.subr.bf16.mxu0 0
    %122 = vmatpush1.bf16.msra.mxu0 0
    %123 = vmatprep.subr.bf16.mxu0 0
    %124 = vmatpush1.bf16.msra.mxu0 0
    %125 = vmatprep.subr.bf16.mxu0 0
    %126 = vmatpush1.bf16.msra.mxu0 0
    %127 = vmatprep.subr.bf16.mxu0 0
    %128 = vmatpush1.bf16.msra.mxu0 0
    %129 = vmatprep.subr.bf16.mxu0 0
    %130 = vmatpush1.bf16.msra.mxu0 0
    %131 = vmatprep.subr.bf16.mxu0 0
    %132 = vmatpush1.bf16.msra.mxu0 0
    %133 = vmatprep.subr.bf16.mxu0 0
    %134 = vmatpush1.bf16.msra.mxu0 0
    %135 = vmatprep.subr.bf16.mxu0 0
    %136 = vmatpush1.bf16.msra.mxu0 0
    %137 = vmatprep.subr.bf16.mxu0 0
    %138 = vmatpush1.bf16.msra.mxu0 0
    %139 = vmatprep.subr.bf16.mxu0 0
    %140 = vmatpush1.bf16.msra.mxu0 0
    %141 = vmatprep.subr.bf16.mxu0 0
    %142 = vmatpush1.bf16.msra.mxu0 0
    %143 = vmatprep.subr.bf16.mxu0 0
    %144 = vmatpush1.bf16.msra.mxu0 0
    %145 = vmatprep.mubr.bf16.mxu0 0
    %146 = vmatmul.mubr.bf16.gmra.mrb[0].mxu0 %v111
    %v147 = vpop.f32.mrb[0].mxu0
    %v148 = vadd.f32 %v78, %v147
    %v149 = vpop.f32.mrb[0].mxu0
    %v150 = vpop.f32.mrb[0].mxu0
    %v151 = vadd.f32 %v78, %v150
    %v152 = vpop.f32.mrb[0].mxu0
    %153 = vdwg.mxu0
    %v154 = vsub.f32 0.0, %v148
    %v155 = vsub.f32 0.0, %v151
    %v156 = vmul.f32 %v154, 1.442695
    %v157 = vpow.pop %v156
    %v158 = vmul.f32 %v155, 1.442695
    %v159 = vpow.pop %v158
    %v160 = vadd.f32 %v157, 1.0
    %v161 = vadd.f32 %v159, 1.0
    %v162 = vrcp.pop %v160
    %v163 = vrcp.pop %v161
    %v164 = vpack.c.bf16 %v163, %v162
    %v165 = vld [vmem:[#allocation7] sm:$0xf]
    %v166 = vld [vmem:[#allocation7 + $0x4] sm:$0xf]
    %v167 = vld [vmem:[#allocation7 + $0x8] sm:$0xf]
    %v168 = vld [vmem:[#allocation7 + $0xc] sm:$0xf]
    %v169 = vld [vmem:[#allocation7 + $0x10] sm:$0xf]
    %v170 = vld [vmem:[#allocation7 + $0x14] sm:$0xf]
    %v171 = vld [vmem:[#allocation7 + $0x18] sm:$0xf]
    %v172 = vld [vmem:[#allocation7 + $0x1c] sm:$0xf]
    %v173 = vld [vmem:[#allocation7 + $0x20] sm:$0xf]
    %v174 = vld [vmem:[#allocation7 + $0x24] sm:$0xf]
    %v175 = vld [vmem:[#allocation7 + $0x28] sm:$0xf]
    %v176 = vld [vmem:[#allocation7 + $0x2c] sm:$0xf]
    %v177 = vld [vmem:[#allocation7 + $0x30] sm:$0xf]
    %v178 = vld [vmem:[#allocation7 + $0x34] sm:$0xf]
    %v179 = vld [vmem:[#allocation7 + $0x38] sm:$0xf]
    %v180 = vld [vmem:[#allocation7 + $0x3c] sm:$0xf]
    %v181 = vld [vmem:[%s4] sm:$0x1]
    %v183 = vlaneseq
    %v184 = vshrl.u32 %v183, 7
    %v185 = vsub.s32 0, %v184
    %v186 = vrot.slane %v181, %v185
    %v204 = vunpack.c.l.b16 %v165
    %v205 = vunpack.c.l.b16 %v166
    %v206 = vunpack.c.l.b16 %v167
    %v207 = vunpack.c.l.b16 %v168
    %v208 = vunpack.c.l.b16 %v169
    %v209 = vunpack.c.l.b16 %v170
    %v210 = vunpack.c.l.b16 %v171
    %v211 = vunpack.c.l.b16 %v172
    %v212 = vunpack.c.l.b16 %v173
    %v213 = vunpack.c.l.b16 %v174
    %v214 = vunpack.c.l.b16 %v175
    %v215 = vunpack.c.l.b16 %v176
    %v216 = vunpack.c.l.b16 %v177
    %v217 = vunpack.c.l.b16 %v178
    %v218 = vunpack.c.l.b16 %v179
    %v219 = vunpack.c.l.b16 %v180
    %v220 = vpack.c.b16 %v205, %v204
    %v221 = vpack.c.b16 %v207, %v206
    %v222 = vpack.c.b16 %v209, %v208
    %v223 = vpack.c.b16 %v211, %v210
    %v224 = vpack.c.b16 %v213, %v212
    %v225 = vpack.c.b16 %v215, %v214
    %v226 = vpack.c.b16 %v217, %v216
    %v227 = vpack.c.b16 %v219, %v218
    %236 = vmatprep.subr.bf16.mxu0 0
    %237 = vmatpush1.bf16.msra.mxu0 %v220
    %238 = vmatprep.subr.bf16.mxu0 0
    %239 = vmatpush1.bf16.msra.mxu0 %v221
    %240 = vmatprep.subr.bf16.mxu0 0
    %241 = vmatpush1.bf16.msra.mxu0 %v222
    %242 = vmatprep.subr.bf16.mxu0 0
    %243 = vmatpush1.bf16.msra.mxu0 %v223
    %244 = vmatprep.subr.bf16.mxu0 0
    %245 = vmatpush1.bf16.msra.mxu0 %v224
    %246 = vmatprep.subr.bf16.mxu0 0
    %247 = vmatpush1.bf16.msra.mxu0 %v225
    %248 = vmatprep.subr.bf16.mxu0 0
    %249 = vmatpush1.bf16.msra.mxu0 %v226
    %250 = vmatprep.subr.bf16.mxu0 0
    %251 = vmatpush1.bf16.msra.mxu0 %v227
    %252 = vmatprep.subr.bf16.mxu0 0
    %253 = vmatpush1.bf16.msra.mxu0 0
    %254 = vmatprep.subr.bf16.mxu0 0
    %255 = vmatpush1.bf16.msra.mxu0 0
    %256 = vmatprep.subr.bf16.mxu0 0
    %257 = vmatpush1.bf16.msra.mxu0 0
    %258 = vmatprep.subr.bf16.mxu0 0
    %259 = vmatpush1.bf16.msra.mxu0 0
    %260 = vmatprep.subr.bf16.mxu0 0
    %261 = vmatpush1.bf16.msra.mxu0 0
    %262 = vmatprep.subr.bf16.mxu0 0
    %263 = vmatpush1.bf16.msra.mxu0 0
    %264 = vmatprep.subr.bf16.mxu0 0
    %265 = vmatpush1.bf16.msra.mxu0 0
    %266 = vmatprep.subr.bf16.mxu0 0
    %267 = vmatpush1.bf16.msra.mxu0 0
    %268 = vmatprep.mubr.bf16.mxu0 0
    %269 = vmatmul.mubr.bf16.gmra.mrb[0].mxu0 %v164
    %v270 = vpop.f32.mrb[0].mxu0
    %v271 = vadd.f32 %v186, %v270
    %v272 = vpop.f32.mrb[0].mxu0
    %v273 = vpop.f32.mrb[0].mxu0
    %v274 = vadd.f32 %v186, %v273
    %v275 = vpop.f32.mrb[0].mxu0
    %276 = vdwg.mxu0
    %277 = vmax.xlane.f32.xlu0 %v271
    %v278 = vpop.xlane.xlu0 %277
    %279 = vmax.xlane.f32.xlu0 %v274
    %v280 = vpop.xlane.xlu0 %279
    %v281 = vsub.f32 %v271, %v278
    %v282 = vsub.f32 %v274, %v280
    %v283 = vmul.f32 %v281, 1.442695
    %v284 = vpow.pop %v283
    %v285 = vmul.f32 %v282, 1.442695
    %v286 = vpow.pop %v285
    %287 = vadd.xlane.f32.xlu0 %v284
    %v288 = vpop.xlane.xlu0 %287
    %289 = vadd.xlane.f32.xlu0 %v286
    %v290 = vpop.xlane.xlu0 %289
    %v291 = vrcp.pop %v288
    %v292 = vrcp.pop %v290
    %v293 = vmul.f32 %v284, %v291
    %v294 = vmul.f32 %v286, %v292
    %295 = vst [vmem:[#allocation8] sm:$0xff] %v293
    %296 = vst [vmem:[#allocation8 + $0x8] sm:$0xff] %v294
    // Predicated region
    $region34: #{tpu_custom_call.1} parent=1 // pred_check
      _
    $region35: #{tpu_custom_call.1} parent=1 // pred_check_branch
      %298 = sbr.rel (0) target = $region37
    $region36: #{tpu_custom_call.1} parent=1 // pred_region
      %s300 = ssub.s32 256, 256
      %301 = vsyncadd [#allocation4], %s300
      %s302 = sshll.u32 [#allocation8], 4
      %s303 = int_to_ptr.vmem [resolvable:$true] %s302
      %308 = dma.vmem_to_hbm [thread:$0]  %s303, 256, %s5, [#allocation4], 128, 128, 8
    $region37: #{tpu_custom_call.1} parent=1 // pred_fallthru
      _
    // Predicated region
    $region38: #{tpu_custom_call.1} parent=1 // pred_check
      _
    $region39: #{tpu_custom_call.1} parent=1 // pred_check_branch
      %310 = sbr.rel (0) target = $region41
    $region40: #{tpu_custom_call.1} parent=1 // pred_region
      %311 = dma.done [#allocation4], 256
    $region41: #{tpu_custom_call.1} parent=1 // pred_fallthru
      _
    %312 = vsyncpa [#allocation3], 1
    %313 = vsyncpa [#allocation6], 1
    %314 = vsyncpa [#allocation4], 1

</llo_original>
